<compile_context>
chip_gen: v5e
topology: v5e:2x2
jax: 0.10.0
libtpu: 0.0.40
codegen_flags: <defaults>
</compile_context>

<pallas_src>
import jax
import jax.numpy as jnp
from jax import lax
from jax.experimental import pallas as pl
from jax.experimental.pallas import tpu as pltpu


# ---------------------------------------------------------------------------
# Wrapper-side constant preprocessing (trace-time; depends only on params and
# static shapes, so in a real model it would be built once at load time).
# ---------------------------------------------------------------------------
def _resize_matrix(in_size, out_size):
    """nn.Upsample(mode='bilinear', align_corners=False) as an (out,in) matrix."""
    scale = in_size / out_size
    src = jnp.maximum(
        (jnp.arange(out_size, dtype=jnp.float32) + 0.5) * scale - 0.5, 0.0)
    i0 = jnp.minimum(jnp.floor(src).astype(jnp.int32), in_size - 1)
    i1 = jnp.minimum(i0 + 1, in_size - 1)
    w1 = src - i0.astype(jnp.float32)
    w0 = 1.0 - w1
    return (w0[:, None] * jax.nn.one_hot(i0, in_size, dtype=jnp.float32) +
            w1[:, None] * jax.nn.one_hot(i1, in_size, dtype=jnp.float32))


def _band_weights(w_hwio, W):
    """3x3 HWIO conv weights -> 3 block-banded (W*Ci, W*Co) matrices (per ky tap).

    B_ky[w_in*Ci+ci, w_out*Co+co] = w[ky, kx, ci, co] with kx = w_in - w_out + 1;
    taps that would read W-padding are simply absent (== zero padding).
      conv_out_row[p] = sum_ky  X_rowpadded[p - 1 + ky] @ B_ky
    """
    _, _, Ci, Co = w_hwio.shape
    eyes = [jnp.eye(W, k=1 - kx, dtype=jnp.float32) for kx in range(3)]
    bands = []
    for ky in range(3):
        B = jnp.zeros((W * Ci, W * Co), jnp.float32)
        for kx in range(3):
            B = B + jnp.einsum('ab,io->aibo', eyes[kx],
                               w_hwio[ky, kx]).reshape(W * Ci, W * Co)
        bands.append(B)
    return jnp.stack(bands, axis=0)  # (3, W*Ci, W*Co)


# ---------------------------------------------------------------------------
# Fused kernel: upsample + concat + conv3x3+ReLU + conv3x3+ReLU.
# Whole batch in one invocation (no grid); batch is folded into M via the
# padded per-sample row blocks, all matmul operands are bf16, accumulate f32.
# ---------------------------------------------------------------------------
def _fused_upsample_double_conv_kernel(x2cat_ref, x1_ref, ryp_ref, rxw_ref,
                                       b1_ref, b2_ref, bias1_ref, bias2_ref,
                                       mask_ref, o_ref):
    f32, bf16 = jnp.float32, jnp.bfloat16
    N, H, _ = o_ref.shape
    Mp = x2cat_ref.shape[0]          # N * Hp padded rows
    Hp = Mp // N
    Mv = Mp - 2                      # conv1 output rows (frame shifted by 1)
    Mw = Mp - 4                      # conv2 output rows (frame shifted by 2)

    # ---- bilinear upsample of x1, written straight into the padded,
    #      lane-concatenated layout: ryp's zero rows give the row halos for
    #      free, rxw's zero columns keep the x2 lanes untouched.  The channel
    #      concat is then a single full-slab VPU add (no jnp.concatenate).
    x1h = jnp.dot(ryp_ref[...], x1_ref[...], preferred_element_type=f32)
    x1up = jnp.dot(x1h.astype(bf16), rxw_ref[...], preferred_element_type=f32)
    xcat = (x2cat_ref[...] + x1up).astype(bf16)           # (Mp, W*(C2+C1))

    # ---- conv1: 3 banded dots, K = W*(C2+C1) = 128, f32 accumulation.
    #      (ky = 1, 2 operands are sublane-offset value slices; cheap here.)
    acc1 = jnp.dot(xcat[0:Mv], b1_ref[0], preferred_element_type=f32)
    acc1 = acc1 + jnp.dot(xcat[1:1 + Mv], b1_ref[1], preferred_element_type=f32)
    acc1 = acc1 + jnp.dot(xcat[2:2 + Mv], b1_ref[2], preferred_element_type=f32)
    # Bias + ReLU, then zero the halo / inter-sample junk rows so they act as
    # conv2's zero padding.
    y1 = (jnp.maximum(acc1 + bias1_ref[...], 0.0) * mask_ref[...]).astype(bf16)

    # ---- conv2 straight from the VMEM-resident y1 (never touches HBM).
    acc2 = jnp.dot(y1[0:Mw], b2_ref[0], preferred_element_type=f32)
    acc2 = acc2 + jnp.dot(y1[1:1 + Mw], b2_ref[1], preferred_element_type=f32)
    acc2 = acc2 + jnp.dot(y1[2:2 + Mw], b2_ref[2], preferred_element_type=f32)
    y2 = jnp.maximum(acc2 + bias2_ref[...], 0.0)          # (Mw, W*Cout) f32

    # ---- per-sample stores of the valid rows: sample n sits at the 8-aligned
    #      offset n*Hp of the conv2 frame, lanes are a full 128 wide.
    for n in range(N):
        o_ref[n, :, :] = y2[n * Hp:n * Hp + H, :].astype(o_ref.dtype)


# ---------------------------------------------------------------------------
# UpSample module (forward only).  External API is NCHW like the PyTorch module.
# ---------------------------------------------------------------------------
def upsample_forward(params, x1_nchw, x2_nchw):
    f32, bf16 = jnp.float32, jnp.bfloat16
    N, C1, H1, W1 = x1_nchw.shape
    _, C2, H, W = x2_nchw.shape
    Cout = params['w1'].shape[-1]
    Ccat = C1 + C2

    # Padded per-sample row block: [OFF zero rows | H data rows | zero rows],
    # height rounded to a sublane multiple so per-sample offsets stay 8-aligned.
    OFF = 2
    Hp = ((H + OFF + 2 + 7) // 8) * 8
    Mp = N * Hp

    # --- layout transforms (one wrapper pass per tensor) ---------------------
    x1f = jnp.transpose(x1_nchw, (0, 2, 3, 1)).reshape(N * H1, W1 * C1).astype(bf16)
    x2f = jnp.transpose(x2_nchw, (0, 2, 3, 1)).reshape(N, H, W * C2)
    x2cat = jnp.pad(x2f, ((0, 0), (OFF, Hp - H - OFF), (0, W * C1)))
    x2cat = x2cat.reshape(Mp, W * Ccat).astype(bf16)       # x2 lanes filled, x1 lanes zero

    # --- bilinear resize matrices --------------------------------------------
    Rh = _resize_matrix(H1, H)                                   # (H, H1)
    Rh_pad = jnp.pad(Rh, ((OFF, Hp - H - OFF), (0, 0)))          # (Hp, H1), zero halo rows
    ryp = jnp.kron(jnp.eye(N, dtype=f32), Rh_pad).astype(bf16)   # (Mp, N*H1) block-diag
    Rw = _resize_matrix(W1, W)                                   # (W, W1)
    rxe = jnp.einsum('ow,ij->wioj', Rw,
                     jnp.eye(C1, dtype=f32)).reshape(W1 * C1, W * C1)
    rxw = jnp.concatenate([jnp.zeros((W1 * C1, W * C2), f32), rxe],
                          axis=1).astype(bf16)                   # lands in the x1_up lanes

    # --- conv weights as banded matrices; conv1 bands merged over the
    #     [x2 | x1_up] lane concat so conv1 is 3 dots at K = W*Ccat -----------
    b1 = jnp.concatenate([_band_weights(params['w1'][:, :, :C2, :], W),
                          _band_weights(params['w1'][:, :, C2:, :], W)],
                         axis=1).astype(bf16)                    # (3, W*Ccat, W*Cout)
    b2 = _band_weights(params['w2'], W).astype(bf16)             # (3, W*Cout, W*Cout)
    bias1 = jnp.tile(params['b1'], W).reshape(1, W * Cout).astype(f32)
    bias2 = jnp.tile(params['b2'], W).reshape(1, W * Cout).astype(f32)

    # Row mask over conv1's output frame: 1 on data rows, 0 on halo/pad rows.
    mrow = jnp.zeros((Hp,), f32).at[OFF:OFF + H].set(1.0)
    mask = jnp.tile(mrow, N)[1:Mp - 1].reshape(Mp - 2, 1)

    # --- advisory cost estimate ----------------------------------------------
    Kcat, Ko = W * Ccat, W * Cout
    flops = 2 * (Mp * (N * H1) * (W1 * C1) + Mp * (W1 * C1) * Kcat
                 + 3 * (Mp - 2) * Kcat * Ko + 3 * (Mp - 4) * Ko * Ko)
    bytes_accessed = (2 * (Mp * Kcat + N * H1 * W1 * C1 + Mp * N * H1
                           + W1 * C1 * Kcat + 3 * Kcat * Ko + 3 * Ko * Ko)
                      + 4 * (2 * Ko + (Mp - 2) + N * H * Ko))

    out = pl.pallas_call(
        _fused_upsample_double_conv_kernel,
        out_shape=jax.ShapeDtypeStruct((N, H, W * Cout), f32),
        compiler_params=pltpu.CompilerParams(
            vmem_limit_bytes=32 * 1024 * 1024),
        cost_estimate=pl.CostEstimate(flops=flops, transcendentals=0,
                                      bytes_accessed=bytes_accessed),
    )(x2cat, x1f, ryp, rxw, b1, b2, bias1, bias2, mask)

    out = out.reshape(N, H, W, Cout)           # un-flatten lanes
    return jnp.transpose(out, (0, 3, 1, 2))    # back to the module's NCHW


def init_params(key, in_channels, out_channels):
    k1, k2, k3, k4 = jax.random.split(key, 4)

    def u(k, shape, fan_in):
        bound = 1.0 / jnp.sqrt(fan_in)
        return jax.random.uniform(k, shape, jnp.float32, -bound, bound)

    return {
        'w1': u(k1, (3, 3, in_channels, out_channels), 9 * in_channels),
        'b1': u(k2, (out_channels,), 9 * in_channels),
        'w2': u(k3, (3, 3, out_channels, out_channels), 9 * out_channels),
        'b2': u(k4, (out_channels,), 9 * out_channels),
    }


# ---------------------------------------------------------------------------
# Pure-JAX f32 reference (correctness assertion).  The bilinear math matches
# PyTorch align_corners=False upsampling; no antialiasing (same as nn.Upsample).
# ---------------------------------------------------------------------------
def _bilinear_resize_nhwc(x, out_h, out_w):
    _, H, W, _ = x.shape
    ry = _resize_matrix(H, out_h)
    rx = _resize_matrix(W, out_w)
    return jnp.einsum('oh,nhwc,pw->nopc', ry, x, rx)


def _ref_forward(params, x1_nchw, x2_nchw):
    x1 = jnp.transpose(x1_nchw, (0, 2, 3, 1))
    x2 = jnp.transpose(x2_nchw, (0, 2, 3, 1))
    x1_up = _bilinear_resize_nhwc(x1, x2.shape[1], x2.shape[2])
    out = jnp.concatenate([x2, x1_up], axis=-1)
    dn = ('NHWC', 'HWIO', 'NHWC')
    out = jax.nn.relu(lax.conv_general_dilated(
        out, params['w1'], (1, 1), 'SAME', dimension_numbers=dn) + params['b1'])
    out = jax.nn.relu(lax.conv_general_dilated(
        out, params['w2'], (1, 1), 'SAME', dimension_numbers=dn) + params['b2'])
    return jnp.transpose(out, (0, 3, 1, 2))


if __name__ == "__main__":
    key = jax.random.PRNGKey(0)
    k_x1, k_x2, k_p = jax.random.split(key, 3)

    N, C1, C2 = 2, 4, 4
    H1, W1 = 8, 8            # low-res decoder feature
    H2, W2 = 16, 16          # skip-connection feature (target size)
    in_channels = C1 + C2    # channels after concat
    out_channels = 8         # -> W2*Cout = 128 lane-dense output

    x1 = jax.random.normal(k_x1, (N, C1, H1, W1), jnp.float32)  # NCHW
    x2 = jax.random.normal(k_x2, (N, C2, H2, W2), jnp.float32)  # NCHW
    params = init_params(k_p, in_channels, out_channels)

    fwd = jax.jit(upsample_forward)
    out = jax.block_until_ready(fwd(params, x1, x2))
    assert out.shape == (N, out_channels, H2, W2), out.shape

    ref = jax.block_until_ready(_ref_forward(params, x1, x2))
    err = float(jnp.max(jnp.abs(out - ref)))
    assert err < 5e-2, err   # bf16 matmul operands, f32 accumulation

    print("KERNEL_OK")
</pallas_src>

<mosaic_0001>
module attributes {stable_mosaic.version = 11 : i64} {
  func.func @_fused_upsample_double_conv_kernel(%arg0: memref<48x128xbf16, #tpu.memory_space<vmem>>, %arg1: memref<16x32xbf16, #tpu.memory_space<vmem>>, %arg2: memref<48x16xbf16, #tpu.memory_space<vmem>>, %arg3: memref<32x128xbf16, #tpu.memory_space<vmem>>, %arg4: memref<3x128x128xbf16, #tpu.memory_space<vmem>>, %arg5: memref<3x128x128xbf16, #tpu.memory_space<vmem>>, %arg6: memref<1x128xf32, #tpu.memory_space<vmem>>, %arg7: memref<1x128xf32, #tpu.memory_space<vmem>>, %arg8: memref<46x1xf32, #tpu.memory_space<vmem>>, %arg9: memref<2x16x128xf32, #tpu.memory_space<vmem>>) attributes {dimension_semantics = [], scalar_prefetch = 0 : i64, scratch_operands = 0 : i64, tpu.core_type = #tpu.core_type<tc>} {
    %c0 = arith.constant 0 : index
    %c0_0 = arith.constant 0 : index
    %0 = vector.load %arg2[%c0, %c0_0] : memref<48x16xbf16, #tpu.memory_space<vmem>>, vector<48x16xbf16>
    %c0_1 = arith.constant 0 : index
    %c0_2 = arith.constant 0 : index
    %1 = vector.load %arg1[%c0_1, %c0_2] : memref<16x32xbf16, #tpu.memory_space<vmem>>, vector<16x32xbf16>
    %cst = arith.constant dense<0.000000e+00> : vector<48x32xf32>
    %2 = tpu.matmul %0, %1, %cst {dimension_numbers = #tpu.dot_dimension_numbers<[1], [0], [0], [1], [0, 0, 1, 1], [], []>} : vector<48x16xbf16>, vector<16x32xbf16>, vector<48x32xf32> -> vector<48x32xf32>
    %3 = arith.truncf %2 : vector<48x32xf32> to vector<48x32xbf16>
    %c0_3 = arith.constant 0 : index
    %c0_4 = arith.constant 0 : index
    %4 = vector.load %arg3[%c0_3, %c0_4] : memref<32x128xbf16, #tpu.memory_space<vmem>>, vector<32x128xbf16>
    %cst_5 = arith.constant dense<0.000000e+00> : vector<48x128xf32>
    %5 = tpu.matmul %3, %4, %cst_5 {dimension_numbers = #tpu.dot_dimension_numbers<[1], [0], [0], [1], [0, 0, 1, 1], [], []>} : vector<48x32xbf16>, vector<32x128xbf16>, vector<48x128xf32> -> vector<48x128xf32>
    %c0_6 = arith.constant 0 : index
    %c0_7 = arith.constant 0 : index
    %6 = vector.load %arg0[%c0_6, %c0_7] : memref<48x128xbf16, #tpu.memory_space<vmem>>, vector<48x128xbf16>
    %7 = arith.extf %6 : vector<48x128xbf16> to vector<48x128xf32>
    %8 = arith.addf %7, %5 : vector<48x128xf32>
    %9 = arith.truncf %8 : vector<48x128xf32> to vector<48x128xbf16>
    %10 = vector.extract_strided_slice %9 {offsets = [0, 0], sizes = [46, 128], strides = [1, 1]} : vector<48x128xbf16> to vector<46x128xbf16>
    %c0_8 = arith.constant 0 : index
    %c0_9 = arith.constant 0 : index
    %c0_10 = arith.constant 0 : index
    %11 = vector.load %arg4[%c0_8, %c0_9, %c0_10] : memref<3x128x128xbf16, #tpu.memory_space<vmem>>, vector<1x128x128xbf16>
    %12 = vector.shape_cast %11 : vector<1x128x128xbf16> to vector<128x128xbf16>
    %cst_11 = arith.constant dense<0.000000e+00> : vector<46x128xf32>
    %13 = tpu.matmul %10, %12, %cst_11 {dimension_numbers = #tpu.dot_dimension_numbers<[1], [0], [0], [1], [0, 0, 1, 1], [], []>} : vector<46x128xbf16>, vector<128x128xbf16>, vector<46x128xf32> -> vector<46x128xf32>
    %14 = vector.extract_strided_slice %9 {offsets = [1, 0], sizes = [46, 128], strides = [1, 1]} : vector<48x128xbf16> to vector<46x128xbf16>
    %c1 = arith.constant 1 : index
    %c0_12 = arith.constant 0 : index
    %c0_13 = arith.constant 0 : index
    %15 = vector.load %arg4[%c1, %c0_12, %c0_13] : memref<3x128x128xbf16, #tpu.memory_space<vmem>>, vector<1x128x128xbf16>
    %16 = vector.shape_cast %15 : vector<1x128x128xbf16> to vector<128x128xbf16>
    %cst_14 = arith.constant dense<0.000000e+00> : vector<46x128xf32>
    %17 = tpu.matmul %14, %16, %cst_14 {dimension_numbers = #tpu.dot_dimension_numbers<[1], [0], [0], [1], [0, 0, 1, 1], [], []>} : vector<46x128xbf16>, vector<128x128xbf16>, vector<46x128xf32> -> vector<46x128xf32>
    %18 = arith.addf %13, %17 : vector<46x128xf32>
    %19 = vector.extract_strided_slice %9 {offsets = [2, 0], sizes = [46, 128], strides = [1, 1]} : vector<48x128xbf16> to vector<46x128xbf16>
    %c2 = arith.constant 2 : index
    %c0_15 = arith.constant 0 : index
    %c0_16 = arith.constant 0 : index
    %20 = vector.load %arg4[%c2, %c0_15, %c0_16] : memref<3x128x128xbf16, #tpu.memory_space<vmem>>, vector<1x128x128xbf16>
    %21 = vector.shape_cast %20 : vector<1x128x128xbf16> to vector<128x128xbf16>
    %cst_17 = arith.constant dense<0.000000e+00> : vector<46x128xf32>
    %22 = tpu.matmul %19, %21, %cst_17 {dimension_numbers = #tpu.dot_dimension_numbers<[1], [0], [0], [1], [0, 0, 1, 1], [], []>} : vector<46x128xbf16>, vector<128x128xbf16>, vector<46x128xf32> -> vector<46x128xf32>
    %23 = arith.addf %18, %22 : vector<46x128xf32>
    %c0_18 = arith.constant 0 : index
    %c0_19 = arith.constant 0 : index
    %24 = vector.load %arg6[%c0_18, %c0_19] : memref<1x128xf32, #tpu.memory_space<vmem>>, vector<1x128xf32>
    %25 = vector.broadcast %24 : vector<1x128xf32> to vector<46x128xf32>
    %26 = arith.addf %23, %25 : vector<46x128xf32>
    %cst_20 = arith.constant 0.000000e+00 : f32
    %27 = vector.broadcast %cst_20 : f32 to vector<46x128xf32>
    %28 = arith.maximumf %26, %27 : vector<46x128xf32>
    %c0_21 = arith.constant 0 : index
    %c0_22 = arith.constant 0 : index
    %29 = vector.load %arg8[%c0_21, %c0_22] : memref<46x1xf32, #tpu.memory_space<vmem>>, vector<46x1xf32>
    %30 = vector.broadcast %29 : vector<46x1xf32> to vector<46x128xf32>
    %31 = arith.mulf %28, %30 : vector<46x128xf32>
    %32 = arith.truncf %31 : vector<46x128xf32> to vector<46x128xbf16>
    %33 = vector.extract_strided_slice %32 {offsets = [0, 0], sizes = [44, 128], strides = [1, 1]} : vector<46x128xbf16> to vector<44x128xbf16>
    %c0_23 = arith.constant 0 : index
    %c0_24 = arith.constant 0 : index
    %c0_25 = arith.constant 0 : index
    %34 = vector.load %arg5[%c0_23, %c0_24, %c0_25] : memref<3x128x128xbf16, #tpu.memory_space<vmem>>, vector<1x128x128xbf16>
    %35 = vector.shape_cast %34 : vector<1x128x128xbf16> to vector<128x128xbf16>
    %cst_26 = arith.constant dense<0.000000e+00> : vector<44x128xf32>
    %36 = tpu.matmul %33, %35, %cst_26 {dimension_numbers = #tpu.dot_dimension_numbers<[1], [0], [0], [1], [0, 0, 1, 1], [], []>} : vector<44x128xbf16>, vector<128x128xbf16>, vector<44x128xf32> -> vector<44x128xf32>
    %37 = vector.extract_strided_slice %32 {offsets = [1, 0], sizes = [44, 128], strides = [1, 1]} : vector<46x128xbf16> to vector<44x128xbf16>
    %c1_27 = arith.constant 1 : index
    %c0_28 = arith.constant 0 : index
    %c0_29 = arith.constant 0 : index
    %38 = vector.load %arg5[%c1_27, %c0_28, %c0_29] : memref<3x128x128xbf16, #tpu.memory_space<vmem>>, vector<1x128x128xbf16>
    %39 = vector.shape_cast %38 : vector<1x128x128xbf16> to vector<128x128xbf16>
    %cst_30 = arith.constant dense<0.000000e+00> : vector<44x128xf32>
    %40 = tpu.matmul %37, %39, %cst_30 {dimension_numbers = #tpu.dot_dimension_numbers<[1], [0], [0], [1], [0, 0, 1, 1], [], []>} : vector<44x128xbf16>, vector<128x128xbf16>, vector<44x128xf32> -> vector<44x128xf32>
    %41 = arith.addf %36, %40 : vector<44x128xf32>
    %42 = vector.extract_strided_slice %32 {offsets = [2, 0], sizes = [44, 128], strides = [1, 1]} : vector<46x128xbf16> to vector<44x128xbf16>
    %c2_31 = arith.constant 2 : index
    %c0_32 = arith.constant 0 : index
    %c0_33 = arith.constant 0 : index
    %43 = vector.load %arg5[%c2_31, %c0_32, %c0_33] : memref<3x128x128xbf16, #tpu.memory_space<vmem>>, vector<1x128x128xbf16>
    %44 = vector.shape_cast %43 : vector<1x128x128xbf16> to vector<128x128xbf16>
    %cst_34 = arith.constant dense<0.000000e+00> : vector<44x128xf32>
    %45 = tpu.matmul %42, %44, %cst_34 {dimension_numbers = #tpu.dot_dimension_numbers<[1], [0], [0], [1], [0, 0, 1, 1], [], []>} : vector<44x128xbf16>, vector<128x128xbf16>, vector<44x128xf32> -> vector<44x128xf32>
    %46 = arith.addf %41, %45 : vector<44x128xf32>
    %c0_35 = arith.constant 0 : index
    %c0_36 = arith.constant 0 : index
    %47 = vector.load %arg7[%c0_35, %c0_36] : memref<1x128xf32, #tpu.memory_space<vmem>>, vector<1x128xf32>
    %48 = vector.broadcast %47 : vector<1x128xf32> to vector<44x128xf32>
    %49 = arith.addf %46, %48 : vector<44x128xf32>
    %cst_37 = arith.constant 0.000000e+00 : f32
    %50 = vector.broadcast %cst_37 : f32 to vector<44x128xf32>
    %51 = arith.maximumf %49, %50 : vector<44x128xf32>
    %52 = vector.extract_strided_slice %51 {offsets = [0, 0], sizes = [16, 128], strides = [1, 1]} : vector<44x128xf32> to vector<16x128xf32>
    %c0_38 = arith.constant 0 : index
    %c0_39 = arith.constant 0 : index
    %c0_40 = arith.constant 0 : index
    %53 = vector.load %arg9[%c0_38, %c0_39, %c0_40] : memref<2x16x128xf32, #tpu.memory_space<vmem>>, vector<1x16x128xf32>
    %54 = vector.shape_cast %53 : vector<1x16x128xf32> to vector<16x128xf32>
    %55 = vector.shape_cast %52 : vector<16x128xf32> to vector<1x16x128xf32>
    tpu.vector_store %arg9[%c0_38, %c0_39, %c0_40], %55 {strides = array<i32>} : memref<2x16x128xf32, #tpu.memory_space<vmem>>, vector<1x16x128xf32>,
    %56 = vector.extract_strided_slice %51 {offsets = [24, 0], sizes = [16, 128], strides = [1, 1]} : vector<44x128xf32> to vector<16x128xf32>
    %c1_41 = arith.constant 1 : index
    %c0_42 = arith.constant 0 : index
    %c0_43 = arith.constant 0 : index
    %57 = vector.load %arg9[%c1_41, %c0_42, %c0_43] : memref<2x16x128xf32, #tpu.memory_space<vmem>>, vector<1x16x128xf32>
    %58 = vector.shape_cast %57 : vector<1x16x128xf32> to vector<16x128xf32>
    %59 = vector.shape_cast %56 : vector<16x128xf32> to vector<1x16x128xf32>
    tpu.vector_store %arg9[%c1_41, %c0_42, %c0_43], %59 {strides = array<i32>} : memref<2x16x128xf32, #tpu.memory_space<vmem>>, vector<1x16x128xf32>,
    return
  }
}

</mosaic_0001>

<llo_original>
// kernel: tile.28
$region0: #{tile.28}
  #allocation0 [shape = 's32[1]{0}', space=sflag, size = 0x4, scoped, tag = 'scoped memory for tile.28']
  %s0 = inlined_call_operand.vmem [shape: f32[24], index: 0, kind: input, shape index: {}]
  %s1 = inlined_call_operand.vmem [shape: f32[2,24], index: 1, kind: output, shape index: {}]
  // Predicated region
  $region2: #{tile.28} parent=0 // pred_check
    _
  $region3: #{tile.28} parent=0 // pred_check_branch
    %3 = sbr.rel (0) target = $region5
  $region4: #{tile.28} parent=0 // pred_region
    _
  $region5: #{tile.28} parent=0 // pred_fallthru
    _
  %v4 = vld [vmem:[%s0] ss:$0 sm:$0xff]
  %5 = vst [vmem:[%s1] sm:$0x3] %v4

// kernel: tile.29
$region0: #{tile.29}
  %s0 = inlined_call_operand.vmem [shape: f32[2,24], index: 0, kind: input, shape index: {}]
  %s1 = inlined_call_operand.vmem [shape: f32[48], index: 1, kind: output, shape index: {}]
  $region1: #{tile.29} parent=0
    #allocation0 [shape = 'u8[4096]{0}', space=vmem, size = 0x1000, scoped, tag = 'scoped mem for output reshape']
    #allocation1 [shape = 'u8[4096]{0}', space=vmem, size = 0x1000, scoped, tag = 'scoped mem for input reshape']
    %s3 = ssub.s32 4, 1
    %v4 = vld [vmem:[%s0] sm:%s3]
    %5 = vst [vmem:[#allocation1] sm:%s3] %v4
    %v6 = vld [vmem:[#allocation1] sm:$0x1]
    %vm7 = vcmask 195584
    %8 = vst.msk [vmem:[#allocation0] sm:$0x1] %vm7, %v6
    %s9 = scalar_lea.vmem [#allocation1], 1
    %v10 = vld [vmem:[%s9] sm:$0x1]
    %11 = vrot.lane.b32.xlu0 %v10, 24
    %v12 = vpop.permute.xlu0 %11
    %vm13 = vcmask 392384
    %14 = vst.msk [vmem:[#allocation0] sm:$0x1] %vm13, %v12
    %s16 = ssub.s32 2, 1
    %v17 = vld [vmem:[#allocation0] sm:%s16]
    %s19 = ssub.s32 2, 1
    %20 = vst [vmem:[%s1] sm:%s19] %v17

// kernel: tile.18
$region0: #{tile.18}
  #allocation0 [shape = 's32[1]{0}', space=sflag, size = 0x4, scoped, tag = 'scoped memory for tile.18']
  %s0 = inlined_call_operand.vmem [shape: f32[8], index: 0, kind: input, shape index: {}]
  %s1 = inlined_call_operand.vmem [shape: f32[16,8], index: 1, kind: output, shape index: {}]
  // Predicated region
  $region2: #{tile.18} parent=0 // pred_check
    _
  $region3: #{tile.18} parent=0 // pred_check_branch
    %3 = sbr.rel (0) target = $region5
  $region4: #{tile.18} parent=0 // pred_region
    _
  $region5: #{tile.18} parent=0 // pred_fallthru
    _
  %v4 = vld [vmem:[%s0] ss:$0 sm:$0xff]
  %5 = vst [vmem:[%s1] sm:$0xff] %v4
  %s6 = scalar_lea.vmem %s1, 8
  %7 = vst [vmem:[%s6] sm:$0xff] %v4

// kernel: tile.19
$region0: #{tile.19}
  %s0 = inlined_call_operand.vmem [shape: f32[16,8], index: 0, kind: input, shape index: {}]
  %s1 = inlined_call_operand.vmem [shape: f32[1,128], index: 1, kind: output, shape index: {}]
  $region1: #{tile.19} parent=0
    #allocation0 [shape = 'u8[4096]{0}', space=vmem, size = 0x1000, scoped, tag = 'scoped mem for output reshape']
    %v2 = vld [vmem:[%s0] sm:$0x1]
    %vm3 = vcmask 64512
    %4 = vst.msk [vmem:[#allocation0] sm:$0x1] %vm3, %v2
    %s5 = scalar_lea.vmem %s0, 15
    %v6 = vld [vmem:[%s5] sm:$0x1]
    %7 = vrot.lane.b32.xlu0 %v6, 120
    %v8 = vpop.permute.xlu0 %7
    %vm9 = vcmask 1048512
    %10 = vst.msk [vmem:[#allocation0] sm:$0x1] %vm9, %v8
    %s11 = scalar_lea.vmem %s0, 14
    %v12 = vld [vmem:[%s11] sm:$0x1]
    %13 = vrot.lane.b32.xlu0 %v12, 112
    %v14 = vpop.permute.xlu0 %13
    %vm15 = vcmask 982912
    %16 = vst.msk [vmem:[#allocation0] sm:$0x1] %vm15, %v14
    %s17 = scalar_lea.vmem %s0, 13
    %v18 = vld [vmem:[%s17] sm:$0x1]
    %19 = vrot.lane.b32.xlu0 %v18, 104
    %v20 = vpop.permute.xlu0 %19
    %vm21 = vcmask 917312
    %22 = vst.msk [vmem:[#allocation0] sm:$0x1] %vm21, %v20
    %s23 = scalar_lea.vmem %s0, 12
    %v24 = vld [vmem:[%s23] sm:$0x1]
    %25 = vrot.lane.b32.xlu0 %v24, 96
    %v26 = vpop.permute.xlu0 %25
    %vm27 = vcmask 851712
    %28 = vst.msk [vmem:[#allocation0] sm:$0x1] %vm27, %v26
    %s29 = scalar_lea.vmem %s0, 11
    %v30 = vld [vmem:[%s29] sm:$0x1]
    %31 = vrot.lane.b32.xlu0 %v30, 88
    %v32 = vpop.permute.xlu0 %31
    %vm33 = vcmask 786112
    %34 = vst.msk [vmem:[#allocation0] sm:$0x1] %vm33, %v32
    %s35 = scalar_lea.vmem %s0, 10
    %v36 = vld [vmem:[%s35] sm:$0x1]
    %37 = vrot.lane.b32.xlu0 %v36, 80
    %v38 = vpop.permute.xlu0 %37
    %vm39 = vcmask 720512
    %40 = vst.msk [vmem:[#allocation0] sm:$0x1] %vm39, %v38
    %s41 = scalar_lea.vmem %s0, 9
    %v42 = vld [vmem:[%s41] sm:$0x1]
    %43 = vrot.lane.b32.xlu0 %v42, 72
    %v44 = vpop.permute.xlu0 %43
    %vm45 = vcmask 654912
    %46 = vst.msk [vmem:[#allocation0] sm:$0x1] %vm45, %v44
    %s47 = scalar_lea.vmem %s0, 8
    %v48 = vld [vmem:[%s47] sm:$0x1]
    %49 = vrot.lane.b32.xlu0 %v48, 64
    %v50 = vpop.permute.xlu0 %49
    %vm51 = vcmask 589312
    %52 = vst.msk [vmem:[#allocation0] sm:$0x1] %vm51, %v50
    %s53 = scalar_lea.vmem %s0, 7
    %v54 = vld [vmem:[%s53] sm:$0x1]
    %55 = vrot.lane.b32.xlu0 %v54, 56
    %v56 = vpop.permute.xlu0 %55
    %vm57 = vcmask 523712
    %58 = vst.msk [vmem:[#allocation0] sm:$0x1] %vm57, %v56
    %s59 = scalar_lea.vmem %s0, 6
    %v60 = vld [vmem:[%s59] sm:$0x1]
    %61 = vrot.lane.b32.xlu0 %v60, 48
    %v62 = vpop.permute.xlu0 %61
    %vm63 = vcmask 458112
    %64 = vst.msk [vmem:[#allocation0] sm:$0x1] %vm63, %v62
    %s65 = scalar_lea.vmem %s0, 5
    %v66 = vld [vmem:[%s65] sm:$0x1]
    %67 = vrot.lane.b32.xlu0 %v66, 40
    %v68 = vpop.permute.xlu0 %67
    %vm69 = vcmask 392512
    %70 = vst.msk [vmem:[#allocation0] sm:$0x1] %vm69, %v68
    %s71 = scalar_lea.vmem %s0, 4
    %v72 = vld [vmem:[%s71] sm:$0x1]
    %73 = vrot.lane.b32.xlu0 %v72, 32
    %v74 = vpop.permute.xlu0 %73
    %vm75 = vcmask 326912
    %76 = vst.msk [vmem:[#allocation0] sm:$0x1] %vm75, %v74
    %s77 = scalar_lea.vmem %s0, 3
    %v78 = vld [vmem:[%s77] sm:$0x1]
    %79 = vrot.lane.b32.xlu0 %v78, 24
    %v80 = vpop.permute.xlu0 %79
    %vm81 = vcmask 261312
    %82 = vst.msk [vmem:[#allocation0] sm:$0x1] %vm81, %v80
    %s83 = scalar_lea.vmem %s0, 2
    %v84 = vld [vmem:[%s83] sm:$0x1]
    %85 = vrot.lane.b32.xlu0 %v84, 16
    %v86 = vpop.permute.xlu0 %85
    %vm87 = vcmask 195712
    %88 = vst.msk [vmem:[#allocation0] sm:$0x1] %vm87, %v86
    %s89 = scalar_lea.vmem %s0, 1
    %v90 = vld [vmem:[%s89] sm:$0x1]
    %91 = vrot.lane.b32.xlu0 %v90, 8
    %v92 = vpop.permute.xlu0 %91
    %vm93 = vcmask 130112
    %94 = vst.msk [vmem:[#allocation0] sm:$0x1] %vm93, %v92
    %s96 = ssub.s32 2, 1
    %v97 = vld [vmem:[#allocation0] sm:%s96]
    %s99 = ssub.s32 2, 1
    %100 = vst [vmem:[%s1] sm:%s99] %v97

// kernel: upsample_forward.1
$region0: #{upsample_forward.1}
  #allocation0 [shape = 'u32[]', space=smem, size = 0x4, offset = 0x4, fixed_abs, tag = 'smem constant byte address 0x4 - core index']
  #allocation1 [shape = 'u32[72,128]{1,0:T(1,128)}', space=vmem, size = 0x9000, scoped, tag = 'internal scratch']
  %s0 = inlined_call_operand.vmem [shape: bf16[48,128], index: 0, kind: input, shape index: {}]
  %s1 = inlined_call_operand.vmem [shape: bf16[16,32], index: 1, kind: input, shape index: {}]
  %s2 = inlined_call_operand.vmem [shape: bf16[48,16], index: 2, kind: input, shape index: {}]
  %s3 = inlined_call_operand.vmem [shape: bf16[32,128], index: 3, kind: input, shape index: {}]
  %s4 = inlined_call_operand.vmem [shape: bf16[3,128,128], index: 4, kind: input, shape index: {}]
  %s5 = inlined_call_operand.vmem [shape: bf16[3,128,128], index: 5, kind: input, shape index: {}]
  %s6 = inlined_call_operand.vmem [shape: f32[1,128], index: 6, kind: input, shape index: {}]
  %s7 = inlined_call_operand.vmem [shape: f32[1,128], index: 7, kind: input, shape index: {}]
  %s8 = inlined_call_operand.vmem [shape: f32[46,1], index: 8, kind: input, shape index: {}]
  %s9 = inlined_call_operand.vmem [shape: f32[2,16,128], index: 9, kind: output, shape index: {}]
  %s10 = sld [smem:[#allocation0]]
  $region46: #{upsample_forward.1} parent=0
    _
  %s12 = ssub.s32 1, %s10
  %s13 = scalar_select 0, %s12, %s10
  // Predicated region
  $region2: #{upsample_forward.1} parent=0 // pred_check
    _
  $region3: #{upsample_forward.1} parent=0 // pred_check_branch
    %15 = sbr.rel (0) target = $region5
  $region4: #{upsample_forward.1} parent=0 // pred_region
    _
  $region5: #{upsample_forward.1} parent=0 // pred_fallthru
    _
  // Predicated region
  $region6: #{upsample_forward.1} parent=0 // pred_check
    _
  $region7: #{upsample_forward.1} parent=0 // pred_check_branch
    %17 = sbr.rel (0) target = $region9
  $region8: #{upsample_forward.1} parent=0 // pred_region
    _
  $region9: #{upsample_forward.1} parent=0 // pred_fallthru
    _
  // Predicated region
  $region10: #{upsample_forward.1} parent=0 // pred_check
    _
  $region11: #{upsample_forward.1} parent=0 // pred_check_branch
    %19 = sbr.rel (0) target = $region13
  $region12: #{upsample_forward.1} parent=0 // pred_region
    _
  $region13: #{upsample_forward.1} parent=0 // pred_fallthru
    _
  // Predicated region
  $region14: #{upsample_forward.1} parent=0 // pred_check
    _
  $region15: #{upsample_forward.1} parent=0 // pred_check_branch
    %21 = sbr.rel (0) target = $region17
  $region16: #{upsample_forward.1} parent=0 // pred_region
    _
  $region17: #{upsample_forward.1} parent=0 // pred_fallthru
    _
  // Predicated region
  $region18: #{upsample_forward.1} parent=0 // pred_check
    _
  $region19: #{upsample_forward.1} parent=0 // pred_check_branch
    %23 = sbr.rel (0) target = $region21
  $region20: #{upsample_forward.1} parent=0 // pred_region
    _
  $region21: #{upsample_forward.1} parent=0 // pred_fallthru
    _
  // Predicated region
  $region22: #{upsample_forward.1} parent=0 // pred_check
    _
  $region23: #{upsample_forward.1} parent=0 // pred_check_branch
    %25 = sbr.rel (0) target = $region25
  $region24: #{upsample_forward.1} parent=0 // pred_region
    _
  $region25: #{upsample_forward.1} parent=0 // pred_fallthru
    _
  // Predicated region
  $region26: #{upsample_forward.1} parent=0 // pred_check
    _
  $region27: #{upsample_forward.1} parent=0 // pred_check_branch
    %27 = sbr.rel (0) target = $region29
  $region28: #{upsample_forward.1} parent=0 // pred_region
    _
  $region29: #{upsample_forward.1} parent=0 // pred_fallthru
    _
  // Predicated region
  $region30: #{upsample_forward.1} parent=0 // pred_check
    _
  $region31: #{upsample_forward.1} parent=0 // pred_check_branch
    %29 = sbr.rel (0) target = $region33
  $region32: #{upsample_forward.1} parent=0 // pred_region
    _
  $region33: #{upsample_forward.1} parent=0 // pred_fallthru
    _
  // Predicated region
  $region34: #{upsample_forward.1} parent=0 // pred_check
    _
  $region35: #{upsample_forward.1} parent=0 // pred_check_branch
    %31 = sbr.rel (0) target = $region37
  $region36: #{upsample_forward.1} parent=0 // pred_region
    _
  $region37: #{upsample_forward.1} parent=0 // pred_fallthru
    _
  %v33 = vld [vmem:[%s2] sm:$0xf]
  %v34 = vld [vmem:[%s2 + $0x4] sm:$0xf]
  %v35 = vld [vmem:[%s2 + $0x8] sm:$0xf]
  %v36 = vld [vmem:[%s2 + $0xc] sm:$0xf]
  %v37 = vld [vmem:[%s2 + $0x10] sm:$0xf]
  %v38 = vld [vmem:[%s2 + $0x14] sm:$0xf]
  %v39 = vld [vmem:[%s1] sm:$0xf]
  %v40 = vld [vmem:[%s1 + $0x4] sm:$0xf]
  %v47 = vunpack.c.l.b16 %v33
  %v48 = vunpack.c.l.b16 %v34
  %v49 = vunpack.c.l.b16 %v35
  %v50 = vunpack.c.l.b16 %v36
  %v51 = vunpack.c.l.b16 %v37
  %v52 = vunpack.c.l.b16 %v38
  %v53 = vpack.c.b16 %v48, %v47
  %v54 = vpack.c.b16 %v50, %v49
  %v55 = vpack.c.b16 %v52, %v51
  %v58 = vunpack.c.l.b16 %v39
  %v59 = vunpack.c.l.b16 %v40
  %v60 = vpack.c.b16 %v59, %v58
  %vm62 = vcmask 130048
  %v64 = vsel %vm62, %v53, 0
  %v67 = vsel %vm62, %v54, 0
  %v70 = vsel %vm62, %v55, 0
  %72 = vmatpush.bf16.msra.mxu0 0
  %73 = vmatpush.bf16.msra.mxu0 0
  %74 = vmatpush.bf16.msra.mxu0 0
  %75 = vmatpush.bf16.msra.mxu0 0
  %76 = vmatpush.bf16.msra.mxu0 0
  %77 = vmatpush.bf16.msra.mxu0 0
  %78 = vmatpush.bf16.msra.mxu0 0
  %79 = vmatpush.bf16.msra.mxu0 %v60
  %80 = vmatmul.bf16.gmra.mxu0 %v64
  %v81 = vpop.f32.mrf.mxu0
  %v82 = vadd.f32 0.0, %v81
  %v83 = vpop.f32.mrf.mxu0
  %v84 = vadd.f32 0.0, %v83
  %85 = vmatmul.bf16.gmra.mxu0 %v67
  %v86 = vpop.f32.mrf.mxu0
  %v87 = vadd.f32 0.0, %v86
  %v88 = vpop.f32.mrf.mxu0
  %v89 = vadd.f32 0.0, %v88
  %90 = vmatmul.bf16.gmra.mxu0 %v70
  %v91 = vpop.f32.mrf.mxu0
  %v92 = vadd.f32 0.0, %v91
  %v93 = vpop.f32.mrf.mxu0
  %v94 = vadd.f32 0.0, %v93
  %95 = vdwg.mxu0
  %v96 = vpack.c.bf16 %v84, %v82
  %v97 = vpack.c.bf16 %v89, %v87
  %v98 = vpack.c.bf16 %v94, %v92
  %v99 = vld [vmem:[%s3] sm:$0xf]
  %v100 = vld [vmem:[%s3 + $0x4] sm:$0xf]
  %v101 = vld [vmem:[%s3 + $0x8] sm:$0xf]
  %v102 = vld [vmem:[%s3 + $0xc] sm:$0xf]
  %v107 = vunpack.c.l.b16 %v99
  %v108 = vunpack.c.l.b16 %v100
  %v109 = vunpack.c.l.b16 %v101
  %v110 = vunpack.c.l.b16 %v102
  %v111 = vpack.c.b16 %v108, %v107
  %v112 = vpack.c.b16 %v110, %v109
  %vm115 = vcmask 261120
  %v117 = vsel %vm115, %v96, 0
  %v120 = vsel %vm115, %v97, 0
  %v123 = vsel %vm115, %v98, 0
  %125 = vmatpush.bf16.msra.mxu0 0
  %126 = vmatpush.bf16.msra.mxu0 0
  %127 = vmatpush.bf16.msra.mxu0 0
  %128 = vmatpush.bf16.msra.mxu0 0
  %129 = vmatpush.bf16.msra.mxu0 0
  %130 = vmatpush.bf16.msra.mxu0 0
  %131 = vmatpush.bf16.msra.mxu0 %v112
  %132 = vmatpush.bf16.msra.mxu0 %v111
  %133 = vmatmul.bf16.gmra.mxu0 %v117
  %v134 = vpop.f32.mrf.mxu0
  %v135 = vadd.f32 0.0, %v134
  %v136 = vpop.f32.mrf.mxu0
  %v137 = vadd.f32 0.0, %v136
  %138 = vmatmul.bf16.gmra.mxu0 %v120
  %v139 = vpop.f32.mrf.mxu0
  %v140 = vadd.f32 0.0, %v139
  %v141 = vpop.f32.mrf.mxu0
  %v142 = vadd.f32 0.0, %v141
  %143 = vmatmul.bf16.gmra.mxu0 %v123
  %v144 = vpop.f32.mrf.mxu0
  %v145 = vadd.f32 0.0, %v144
  %v146 = vpop.f32.mrf.mxu0
  %v147 = vadd.f32 0.0, %v146
  %148 = vdwg.mxu0
  %v149 = vld [vmem:[%s0] sm:$0xf]
  %v150 = vld [vmem:[%s0 + $0x4] sm:$0xf]
  %v151 = vld [vmem:[%s0 + $0x8] sm:$0xf]
  %v152 = vld [vmem:[%s0 + $0xc] sm:$0xf]
  %v153 = vld [vmem:[%s0 + $0x10] sm:$0xf]
  %v154 = vld [vmem:[%s0 + $0x14] sm:$0xf]
  %v155 = vunpack.c.l.bf16 %v149
  %v156 = vunpack.c.l.bf16 %v150
  %v157 = vunpack.c.l.bf16 %v151
  %v158 = vunpack.c.l.bf16 %v152
  %v159 = vunpack.c.l.bf16 %v153
  %v160 = vunpack.c.l.bf16 %v154
  %v161 = vadd.f32 %v155, %v135
  %v162 = vadd.f32 %v156, %v137
  %v163 = vadd.f32 %v157, %v140
  %v164 = vadd.f32 %v158, %v142
  %v165 = vadd.f32 %v159, %v145
  %v166 = vadd.f32 %v160, %v147
  %v167 = vpack.c.bf16 %v161, %v161
  %v168 = vpack.c.bf16 %v162, %v162
  %v169 = vpack.c.bf16 %v163, %v163
  %v170 = vpack.c.bf16 %v164, %v164
  %v171 = vpack.c.bf16 %v165, %v165
  %v172 = vpack.c.bf16 %v166, %v166
  %v173 = vld [vmem:[%s4] sm:$0xf]
  %v174 = vld [vmem:[%s4 + $0x4] sm:$0xf]
  %v175 = vld [vmem:[%s4 + $0x8] sm:$0xf]
  %v176 = vld [vmem:[%s4 + $0xc] sm:$0xf]
  %v177 = vld [vmem:[%s4 + $0x10] sm:$0xf]
  %v178 = vld [vmem:[%s4 + $0x14] sm:$0xf]
  %v179 = vld [vmem:[%s4 + $0x18] sm:$0xf]
  %v180 = vld [vmem:[%s4 + $0x1c] sm:$0xf]
  %v181 = vld [vmem:[%s4 + $0x20] sm:$0xf]
  %v182 = vld [vmem:[%s4 + $0x24] sm:$0xf]
  %v183 = vld [vmem:[%s4 + $0x28] sm:$0xf]
  %v184 = vld [vmem:[%s4 + $0x2c] sm:$0xf]
  %v185 = vld [vmem:[%s4 + $0x30] sm:$0xf]
  %v186 = vld [vmem:[%s4 + $0x34] sm:$0xf]
  %v187 = vld [vmem:[%s4 + $0x38] sm:$0xf]
  %v188 = vld [vmem:[%s4 + $0x3c] sm:$0xf]
  %s189 = scalar_lea.vmem %s4, 64
  %v190 = vld [vmem:[%s189] sm:$0xf]
  %v191 = vld [vmem:[%s189 + $0x4] sm:$0xf]
  %v192 = vld [vmem:[%s189 + $0x8] sm:$0xf]
  %v193 = vld [vmem:[%s189 + $0xc] sm:$0xf]
  %v194 = vld [vmem:[%s189 + $0x10] sm:$0xf]
  %v195 = vld [vmem:[%s189 + $0x14] sm:$0xf]
  %v196 = vld [vmem:[%s189 + $0x18] sm:$0xf]
  %v197 = vld [vmem:[%s189 + $0x1c] sm:$0xf]
  %v198 = vld [vmem:[%s189 + $0x20] sm:$0xf]
  %v199 = vld [vmem:[%s189 + $0x24] sm:$0xf]
  %v200 = vld [vmem:[%s189 + $0x28] sm:$0xf]
  %v201 = vld [vmem:[%s189 + $0x2c] sm:$0xf]
  %v202 = vld [vmem:[%s189 + $0x30] sm:$0xf]
  %v203 = vld [vmem:[%s189 + $0x34] sm:$0xf]
  %v204 = vld [vmem:[%s189 + $0x38] sm:$0xf]
  %v205 = vld [vmem:[%s189 + $0x3c] sm:$0xf]
  %v212 = vunpack.c.l.b16 %v167
  %v213 = vunpack.c.l.b16 %v168
  %v214 = vunpack.c.l.b16 %v169
  %v215 = vunpack.c.l.b16 %v170
  %v216 = vunpack.c.l.b16 %v171
  %v217 = vunpack.c.l.b16 %v172
  %v218 = vpack.c.b16 %v213, %v212
  %v219 = vpack.c.b16 %v215, %v214
  %v220 = vpack.c.b16 %v217, %v216
  %vm221 = vsmask.f32 7424
  %v223 = vshrl.u32 %v218, 16
  %v225 = vshll.u32 %v218, 16
  %v227 = vrot.slane %v225, 1
  %v228 = vor.u32 %v223, %v227
  %v230 = vshll.u32 %v219, 16
  %v232 = vrot.slane %v230, 1
  %v233 = vsel %vm221, %v228, %v232
  %v234 = vshrl.u32 %v219, 16
  %v236 = vor.u32 %v234, %v232
  %v238 = vshll.u32 %v220, 16
  %v240 = vrot.slane %v238, 1
  %v241 = vsel %vm221, %v236, %v240
  %v242 = vshrl.u32 %v220, 16
  %v244 = vor.u32 %v242, %v240
  %v264 = vunpack.c.l.b16 %v190
  %v265 = vunpack.c.l.b16 %v191
  %v266 = vunpack.c.l.b16 %v192
  %v267 = vunpack.c.l.b16 %v193
  %v268 = vunpack.c.l.b16 %v194
  %v269 = vunpack.c.l.b16 %v195
  %v270 = vunpack.c.l.b16 %v196
  %v271 = vunpack.c.l.b16 %v197
  %v272 = vunpack.c.l.b16 %v198
  %v273 = vunpack.c.l.b16 %v199
  %v274 = vunpack.c.l.b16 %v200
  %v275 = vunpack.c.l.b16 %v201
  %v276 = vunpack.c.l.b16 %v202
  %v277 = vunpack.c.l.b16 %v203
  %v278 = vunpack.c.l.b16 %v204
  %v279 = vunpack.c.l.b16 %v205
  %v280 = vpack.c.b16 %v265, %v264
  %v281 = vpack.c.b16 %v267, %v266
  %v282 = vpack.c.b16 %v269, %v268
  %v283 = vpack.c.b16 %v271, %v270
  %v284 = vpack.c.b16 %v273, %v272
  %v285 = vpack.c.b16 %v275, %v274
  %v286 = vpack.c.b16 %v277, %v276
  %v287 = vpack.c.b16 %v279, %v278
  %296 = vmatpush.bf16.msra.mxu0 %v287
  %297 = vmatpush.bf16.msra.mxu0 %v286
  %298 = vmatpush.bf16.msra.mxu0 %v285
  %299 = vmatpush.bf16.msra.mxu0 %v284
  %300 = vmatpush.bf16.msra.mxu0 %v283
  %301 = vmatpush.bf16.msra.mxu0 %v282
  %302 = vmatpush.bf16.msra.mxu0 %v281
  %303 = vmatpush.bf16.msra.mxu0 %v280
  %304 = vmatmul.bf16.gmra.mxu0 %v233
  %v305 = vpop.f32.mrf.mxu0
  %v306 = vadd.f32 0.0, %v305
  %v307 = vpop.f32.mrf.mxu0
  %v308 = vadd.f32 0.0, %v307
  %309 = vmatmul.bf16.gmra.mxu0 %v241
  %v310 = vpop.f32.mrf.mxu0
  %v311 = vadd.f32 0.0, %v310
  %v312 = vpop.f32.mrf.mxu0
  %v313 = vadd.f32 0.0, %v312
  %314 = vmatmul.bf16.gmra.mxu0 %v244
  %v315 = vpop.f32.mrf.mxu0
  %v316 = vadd.f32 0.0, %v315
  %v317 = vpop.f32.mrf.mxu0
  %v318 = vadd.f32 0.0, %v317
  %319 = vdwg.mxu0
  %v339 = vunpack.c.l.b16 %v173
  %v340 = vunpack.c.l.b16 %v174
  %v341 = vunpack.c.l.b16 %v175
  %v342 = vunpack.c.l.b16 %v176
  %v343 = vunpack.c.l.b16 %v177
  %v344 = vunpack.c.l.b16 %v178
  %v345 = vunpack.c.l.b16 %v179
  %v346 = vunpack.c.l.b16 %v180
  %v347 = vunpack.c.l.b16 %v181
  %v348 = vunpack.c.l.b16 %v182
  %v349 = vunpack.c.l.b16 %v183
  %v350 = vunpack.c.l.b16 %v184
  %v351 = vunpack.c.l.b16 %v185
  %v352 = vunpack.c.l.b16 %v186
  %v353 = vunpack.c.l.b16 %v187
  %v354 = vunpack.c.l.b16 %v188
  %v355 = vpack.c.b16 %v340, %v339
  %v356 = vpack.c.b16 %v342, %v341
  %v357 = vpack.c.b16 %v344, %v343
  %v358 = vpack.c.b16 %v346, %v345
  %v359 = vpack.c.b16 %v348, %v347
  %v360 = vpack.c.b16 %v350, %v349
  %v361 = vpack.c.b16 %v352, %v351
  %v362 = vpack.c.b16 %v354, %v353
  %371 = vmatpush.bf16.msra.mxu0 %v362
  %372 = vmatpush.bf16.msra.mxu0 %v361
  %373 = vmatpush.bf16.msra.mxu0 %v360
  %374 = vmatpush.bf16.msra.mxu0 %v359
  %375 = vmatpush.bf16.msra.mxu0 %v358
  %376 = vmatpush.bf16.msra.mxu0 %v357
  %377 = vmatpush.bf16.msra.mxu0 %v356
  %378 = vmatpush.bf16.msra.mxu0 %v355
  %379 = vmatmul.bf16.gmra.mxu0 %v218
  %v380 = vpop.f32.mrf.mxu0
  %v381 = vadd.f32 %v306, %v380
  %v382 = vpop.f32.mrf.mxu0
  %v383 = vadd.f32 %v308, %v382
  %384 = vmatmul.bf16.gmra.mxu0 %v219
  %v385 = vpop.f32.mrf.mxu0
  %v386 = vadd.f32 %v311, %v385
  %v387 = vpop.f32.mrf.mxu0
  %v388 = vadd.f32 %v313, %v387
  %389 = vmatmul.bf16.gmra.mxu0 %v220
  %v390 = vpop.f32.mrf.mxu0
  %v391 = vadd.f32 %v316, %v390
  %v392 = vpop.f32.mrf.mxu0
  %v393 = vadd.f32 %v318, %v392
  %394 = vdwg.mxu0
  %s395 = scalar_lea.vmem %s4, 128
  %v396 = vld [vmem:[%s395] sm:$0xf]
  %v397 = vld [vmem:[%s395 + $0x4] sm:$0xf]
  %v398 = vld [vmem:[%s395 + $0x8] sm:$0xf]
  %v399 = vld [vmem:[%s395 + $0xc] sm:$0xf]
  %v400 = vld [vmem:[%s395 + $0x10] sm:$0xf]
  %v401 = vld [vmem:[%s395 + $0x14] sm:$0xf]
  %v402 = vld [vmem:[%s395 + $0x18] sm:$0xf]
  %v403 = vld [vmem:[%s395 + $0x1c] sm:$0xf]
  %v404 = vld [vmem:[%s395 + $0x20] sm:$0xf]
  %v405 = vld [vmem:[%s395 + $0x24] sm:$0xf]
  %v406 = vld [vmem:[%s395 + $0x28] sm:$0xf]
  %v407 = vld [vmem:[%s395 + $0x2c] sm:$0xf]
  %v408 = vld [vmem:[%s395 + $0x30] sm:$0xf]
  %v409 = vld [vmem:[%s395 + $0x34] sm:$0xf]
  %v410 = vld [vmem:[%s395 + $0x38] sm:$0xf]
  %v411 = vld [vmem:[%s395 + $0x3c] sm:$0xf]
  %vm412 = vcmask 1046528
  %v413 = vrot.slane %v218, 1
  %v414 = vrot.slane %v219, 1
  %v415 = vsel %vm412, %v413, %v414
  %v416 = vrot.slane %v220, 1
  %v417 = vsel %vm412, %v414, %v416
  %v437 = vunpack.c.l.b16 %v396
  %v438 = vunpack.c.l.b16 %v397
  %v439 = vunpack.c.l.b16 %v398
  %v440 = vunpack.c.l.b16 %v399
  %v441 = vunpack.c.l.b16 %v400
  %v442 = vunpack.c.l.b16 %v401
  %v443 = vunpack.c.l.b16 %v402
  %v444 = vunpack.c.l.b16 %v403
  %v445 = vunpack.c.l.b16 %v404
  %v446 = vunpack.c.l.b16 %v405
  %v447 = vunpack.c.l.b16 %v406
  %v448 = vunpack.c.l.b16 %v407
  %v449 = vunpack.c.l.b16 %v408
  %v450 = vunpack.c.l.b16 %v409
  %v451 = vunpack.c.l.b16 %v410
  %v452 = vunpack.c.l.b16 %v411
  %v453 = vpack.c.b16 %v438, %v437
  %v454 = vpack.c.b16 %v440, %v439
  %v455 = vpack.c.b16 %v442, %v441
  %v456 = vpack.c.b16 %v444, %v443
  %v457 = vpack.c.b16 %v446, %v445
  %v458 = vpack.c.b16 %v448, %v447
  %v459 = vpack.c.b16 %v450, %v449
  %v460 = vpack.c.b16 %v452, %v451
  %469 = vmatpush.bf16.msra.mxu0 %v460
  %470 = vmatpush.bf16.msra.mxu0 %v459
  %471 = vmatpush.bf16.msra.mxu0 %v458
  %472 = vmatpush.bf16.msra.mxu0 %v457
  %473 = vmatpush.bf16.msra.mxu0 %v456
  %474 = vmatpush.bf16.msra.mxu0 %v455
  %475 = vmatpush.bf16.msra.mxu0 %v454
  %476 = vmatpush.bf16.msra.mxu0 %v453
  %477 = vmatmul.bf16.gmra.mxu0 %v415
  %v478 = vpop.f32.mrf.mxu0
  %v479 = vadd.f32 0.0, %v478
  %v480 = vpop.f32.mrf.mxu0
  %v481 = vadd.f32 0.0, %v480
  %482 = vmatmul.bf16.gmra.mxu0 %v417
  %v483 = vpop.f32.mrf.mxu0
  %v484 = vadd.f32 0.0, %v483
  %v485 = vpop.f32.mrf.mxu0
  %v486 = vadd.f32 0.0, %v485
  %487 = vmatmul.bf16.gmra.mxu0 %v416
  %v488 = vpop.f32.mrf.mxu0
  %v489 = vadd.f32 0.0, %v488
  %v490 = vpop.f32.mrf.mxu0
  %v491 = vadd.f32 0.0, %v490
  %492 = vdwg.mxu0
  %v493 = vadd.f32 %v381, %v479
  %v494 = vadd.f32 %v383, %v481
  %v495 = vadd.f32 %v386, %v484
  %v496 = vadd.f32 %v388, %v486
  %v497 = vadd.f32 %v391, %v489
  %v498 = vadd.f32 %v393, %v491
  %v499 = vld [vmem:[%s6] sm:$0x1]
  %v501 = vperm.slane %v499, 0
  %v503 = vadd.f32 %v493, %v501
  %v504 = vadd.f32 %v494, %v501
  %v505 = vadd.f32 %v495, %v501
  %v506 = vadd.f32 %v496, %v501
  %v507 = vadd.f32 %v497, %v501
  %v508 = vadd.f32 %v498, %v501
  %v509 = vmax.f32 %v503, 0.0
  %v510 = vmax.f32 %v504, 0.0
  %v511 = vmax.f32 %v505, 0.0
  %v512 = vmax.f32 %v506, 0.0
  %v513 = vmax.f32 %v507, 0.0
  %v514 = vmax.f32 %v508, 0.0
  %v515 = vld [vmem:[%s8] sm:$0xff]
  %v516 = vld [vmem:[%s8 + $0x8] sm:$0xff]
  %v517 = vld [vmem:[%s8 + $0x10] sm:$0xff]
  %v518 = vld [vmem:[%s8 + $0x18] sm:$0xff]
  %v519 = vld [vmem:[%s8 + $0x20] sm:$0xff]
  %v520 = vld [vmem:[%s8 + $0x28] sm:$0x3f]
  %522 = vset.pattern.permute.xlu0 0
  %523 = vperm.xlu0 %522, %v515
  %v524 = vpop.permute.xlu0 %523
  %527 = vset.pattern.permute.xlu0 0
  %528 = vperm.xlu0 %527, %v516
  %v529 = vpop.permute.xlu0 %528
  %532 = vset.pattern.permute.xlu0 0
  %533 = vperm.xlu0 %532, %v517
  %v534 = vpop.permute.xlu0 %533
  %537 = vset.pattern.permute.xlu0 0
  %538 = vperm.xlu0 %537, %v518
  %v539 = vpop.permute.xlu0 %538
  %542 = vset.pattern.permute.xlu0 0
  %543 = vperm.xlu0 %542, %v519
  %v544 = vpop.permute.xlu0 %543
  %547 = vset.pattern.permute.xlu0 0
  %548 = vperm.xlu0 %547, %v520
  %v549 = vpop.permute.xlu0 %548
  %v551 = vmul.f32 %v509, %v524
  %v552 = vmul.f32 %v510, %v529
  %v553 = vmul.f32 %v511, %v534
  %v554 = vmul.f32 %v512, %v539
  %v555 = vmul.f32 %v513, %v544
  %v556 = vmul.f32 %v514, %v549
  %v557 = vpack.c.bf16 %v551, %v551
  %v558 = vpack.c.bf16 %v552, %v552
  %v559 = vpack.c.bf16 %v553, %v553
  %v560 = vpack.c.bf16 %v554, %v554
  %v561 = vpack.c.bf16 %v555, %v555
  %v562 = vpack.c.bf16 %v556, %v556
  %v563 = vld [vmem:[%s5] sm:$0xf]
  %v564 = vld [vmem:[%s5 + $0x4] sm:$0xf]
  %v565 = vld [vmem:[%s5 + $0x8] sm:$0xf]
  %v566 = vld [vmem:[%s5 + $0xc] sm:$0xf]
  %v567 = vld [vmem:[%s5 + $0x10] sm:$0xf]
  %v568 = vld [vmem:[%s5 + $0x14] sm:$0xf]
  %v569 = vld [vmem:[%s5 + $0x18] sm:$0xf]
  %v570 = vld [vmem:[%s5 + $0x1c] sm:$0xf]
  %v571 = vld [vmem:[%s5 + $0x20] sm:$0xf]
  %v572 = vld [vmem:[%s5 + $0x24] sm:$0xf]
  %v573 = vld [vmem:[%s5 + $0x28] sm:$0xf]
  %v574 = vld [vmem:[%s5 + $0x2c] sm:$0xf]
  %v575 = vld [vmem:[%s5 + $0x30] sm:$0xf]
  %v576 = vld [vmem:[%s5 + $0x34] sm:$0xf]
  %v577 = vld [vmem:[%s5 + $0x38] sm:$0xf]
  %v578 = vld [vmem:[%s5 + $0x3c] sm:$0xf]
  %s579 = scalar_lea.vmem %s5, 64
  %v580 = vld [vmem:[%s579] sm:$0xf]
  %v581 = vld [vmem:[%s579 + $0x4] sm:$0xf]
  %v582 = vld [vmem:[%s579 + $0x8] sm:$0xf]
  %v583 = vld [vmem:[%s579 + $0xc] sm:$0xf]
  %v584 = vld [vmem:[%s579 + $0x10] sm:$0xf]
  %v585 = vld [vmem:[%s579 + $0x14] sm:$0xf]
  %v586 = vld [vmem:[%s579 + $0x18] sm:$0xf]
  %v587 = vld [vmem:[%s579 + $0x1c] sm:$0xf]
  %v588 = vld [vmem:[%s579 + $0x20] sm:$0xf]
  %v589 = vld [vmem:[%s579 + $0x24] sm:$0xf]
  %v590 = vld [vmem:[%s579 + $0x28] sm:$0xf]
  %v591 = vld [vmem:[%s579 + $0x2c] sm:$0xf]
  %v592 = vld [vmem:[%s579 + $0x30] sm:$0xf]
  %v593 = vld [vmem:[%s579 + $0x34] sm:$0xf]
  %v594 = vld [vmem:[%s579 + $0x38] sm:$0xf]
  %v595 = vld [vmem:[%s579 + $0x3c] sm:$0xf]
  %v602 = vunpack.c.l.b16 %v557
  %v603 = vunpack.c.l.b16 %v558
  %v604 = vunpack.c.l.b16 %v559
  %v605 = vunpack.c.l.b16 %v560
  %v606 = vunpack.c.l.b16 %v561
  %v607 = vunpack.c.l.b16 %v562
  %v608 = vpack.c.b16 %v603, %v602
  %v609 = vpack.c.b16 %v605, %v604
  %v610 = vpack.c.b16 %v607, %v606
  %v612 = vshrl.u32 %v608, 16
  %v614 = vshll.u32 %v608, 16
  %v616 = vrot.slane %v614, 1
  %v617 = vor.u32 %v612, %v616
  %v619 = vshll.u32 %v609, 16
  %v621 = vrot.slane %v619, 1
  %v622 = vsel %vm221, %v617, %v621
  %v623 = vshrl.u32 %v609, 16
  %v625 = vor.u32 %v623, %v621
  %v627 = vshll.u32 %v610, 16
  %v629 = vrot.slane %v627, 1
  %v630 = vsel %vm221, %v625, %v629
  %v631 = vshrl.u32 %v610, 16
  %v633 = vor.u32 %v631, %v629
  %v653 = vunpack.c.l.b16 %v580
  %v654 = vunpack.c.l.b16 %v581
  %v655 = vunpack.c.l.b16 %v582
  %v656 = vunpack.c.l.b16 %v583
  %v657 = vunpack.c.l.b16 %v584
  %v658 = vunpack.c.l.b16 %v585
  %v659 = vunpack.c.l.b16 %v586
  %v660 = vunpack.c.l.b16 %v587
  %v661 = vunpack.c.l.b16 %v588
  %v662 = vunpack.c.l.b16 %v589
  %v663 = vunpack.c.l.b16 %v590
  %v664 = vunpack.c.l.b16 %v591
  %v665 = vunpack.c.l.b16 %v592
  %v666 = vunpack.c.l.b16 %v593
  %v667 = vunpack.c.l.b16 %v594
  %v668 = vunpack.c.l.b16 %v595
  %v669 = vpack.c.b16 %v654, %v653
  %v670 = vpack.c.b16 %v656, %v655
  %v671 = vpack.c.b16 %v658, %v657
  %v672 = vpack.c.b16 %v660, %v659
  %v673 = vpack.c.b16 %v662, %v661
  %v674 = vpack.c.b16 %v664, %v663
  %v675 = vpack.c.b16 %v666, %v665
  %v676 = vpack.c.b16 %v668, %v667
  %685 = vmatpush.bf16.msra.mxu0 %v676
  %686 = vmatpush.bf16.msra.mxu0 %v675
  %687 = vmatpush.bf16.msra.mxu0 %v674
  %688 = vmatpush.bf16.msra.mxu0 %v673
  %689 = vmatpush.bf16.msra.mxu0 %v672
  %690 = vmatpush.bf16.msra.mxu0 %v671
  %691 = vmatpush.bf16.msra.mxu0 %v670
  %692 = vmatpush.bf16.msra.mxu0 %v669
  %693 = vmatmul.bf16.gmra.mxu0 %v622
  %v694 = vpop.f32.mrf.mxu0
  %v695 = vadd.f32 0.0, %v694
  %v696 = vpop.f32.mrf.mxu0
  %v697 = vadd.f32 0.0, %v696
  %698 = vmatmul.bf16.gmra.mxu0 %v630
  %v699 = vpop.f32.mrf.mxu0
  %v700 = vpop.f32.mrf.mxu0
  %v701 = vadd.f32 0.0, %v700
  %702 = vmatmul.bf16.gmra.mxu0 %v633
  %v703 = vpop.f32.mrf.mxu0
  %v704 = vadd.f32 0.0, %v703
  %v705 = vpop.f32.mrf.mxu0
  %706 = vdwg.mxu0
  %v726 = vunpack.c.l.b16 %v563
  %v727 = vunpack.c.l.b16 %v564
  %v728 = vunpack.c.l.b16 %v565
  %v729 = vunpack.c.l.b16 %v566
  %v730 = vunpack.c.l.b16 %v567
  %v731 = vunpack.c.l.b16 %v568
  %v732 = vunpack.c.l.b16 %v569
  %v733 = vunpack.c.l.b16 %v570
  %v734 = vunpack.c.l.b16 %v571
  %v735 = vunpack.c.l.b16 %v572
  %v736 = vunpack.c.l.b16 %v573
  %v737 = vunpack.c.l.b16 %v574
  %v738 = vunpack.c.l.b16 %v575
  %v739 = vunpack.c.l.b16 %v576
  %v740 = vunpack.c.l.b16 %v577
  %v741 = vunpack.c.l.b16 %v578
  %v742 = vpack.c.b16 %v727, %v726
  %v743 = vpack.c.b16 %v729, %v728
  %v744 = vpack.c.b16 %v731, %v730
  %v745 = vpack.c.b16 %v733, %v732
  %v746 = vpack.c.b16 %v735, %v734
  %v747 = vpack.c.b16 %v737, %v736
  %v748 = vpack.c.b16 %v739, %v738
  %v749 = vpack.c.b16 %v741, %v740
  %758 = vmatpush.bf16.msra.mxu0 %v749
  %759 = vmatpush.bf16.msra.mxu0 %v748
  %760 = vmatpush.bf16.msra.mxu0 %v747
  %761 = vmatpush.bf16.msra.mxu0 %v746
  %762 = vmatpush.bf16.msra.mxu0 %v745
  %763 = vmatpush.bf16.msra.mxu0 %v744
  %764 = vmatpush.bf16.msra.mxu0 %v743
  %765 = vmatpush.bf16.msra.mxu0 %v742
  %766 = vmatmul.bf16.gmra.mxu0 %v608
  %v767 = vpop.f32.mrf.mxu0
  %v768 = vadd.f32 %v695, %v767
  %v769 = vpop.f32.mrf.mxu0
  %v770 = vadd.f32 %v697, %v769
  %771 = vmatmul.bf16.gmra.mxu0 %v609
  %v772 = vpop.f32.mrf.mxu0
  %v773 = vpop.f32.mrf.mxu0
  %v774 = vadd.f32 %v701, %v773
  %775 = vmatmul.bf16.gmra.mxu0 %v610
  %v776 = vpop.f32.mrf.mxu0
  %v777 = vadd.f32 %v704, %v776
  %v778 = vpop.f32.mrf.mxu0
  %779 = vdwg.mxu0
  %s780 = scalar_lea.vmem %s5, 128
  %v781 = vld [vmem:[%s780] sm:$0xf]
  %v782 = vld [vmem:[%s780 + $0x4] sm:$0xf]
  %v783 = vld [vmem:[%s780 + $0x8] sm:$0xf]
  %v784 = vld [vmem:[%s780 + $0xc] sm:$0xf]
  %v785 = vld [vmem:[%s780 + $0x10] sm:$0xf]
  %v786 = vld [vmem:[%s780 + $0x14] sm:$0xf]
  %v787 = vld [vmem:[%s780 + $0x18] sm:$0xf]
  %v788 = vld [vmem:[%s780 + $0x1c] sm:$0xf]
  %v789 = vld [vmem:[%s780 + $0x20] sm:$0xf]
  %v790 = vld [vmem:[%s780 + $0x24] sm:$0xf]
  %v791 = vld [vmem:[%s780 + $0x28] sm:$0xf]
  %v792 = vld [vmem:[%s780 + $0x2c] sm:$0xf]
  %v793 = vld [vmem:[%s780 + $0x30] sm:$0xf]
  %v794 = vld [vmem:[%s780 + $0x34] sm:$0xf]
  %v795 = vld [vmem:[%s780 + $0x38] sm:$0xf]
  %v796 = vld [vmem:[%s780 + $0x3c] sm:$0xf]
  %v797 = vrot.slane %v608, 1
  %v798 = vrot.slane %v609, 1
  %v799 = vsel %vm412, %v797, %v798
  %v800 = vrot.slane %v610, 1
  %v801 = vsel %vm412, %v798, %v800
  %v821 = vunpack.c.l.b16 %v781
  %v822 = vunpack.c.l.b16 %v782
  %v823 = vunpack.c.l.b16 %v783
  %v824 = vunpack.c.l.b16 %v784
  %v825 = vunpack.c.l.b16 %v785
  %v826 = vunpack.c.l.b16 %v786
  %v827 = vunpack.c.l.b16 %v787
  %v828 = vunpack.c.l.b16 %v788
  %v829 = vunpack.c.l.b16 %v789
  %v830 = vunpack.c.l.b16 %v790
  %v831 = vunpack.c.l.b16 %v791
  %v832 = vunpack.c.l.b16 %v792
  %v833 = vunpack.c.l.b16 %v793
  %v834 = vunpack.c.l.b16 %v794
  %v835 = vunpack.c.l.b16 %v795
  %v836 = vunpack.c.l.b16 %v796
  %v837 = vpack.c.b16 %v822, %v821
  %v838 = vpack.c.b16 %v824, %v823
  %v839 = vpack.c.b16 %v826, %v825
  %v840 = vpack.c.b16 %v828, %v827
  %v841 = vpack.c.b16 %v830, %v829
  %v842 = vpack.c.b16 %v832, %v831
  %v843 = vpack.c.b16 %v834, %v833
  %v844 = vpack.c.b16 %v836, %v835
  %853 = vmatpush.bf16.msra.mxu0 %v844
  %854 = vmatpush.bf16.msra.mxu0 %v843
  %855 = vmatpush.bf16.msra.mxu0 %v842
  %856 = vmatpush.bf16.msra.mxu0 %v841
  %857 = vmatpush.bf16.msra.mxu0 %v840
  %858 = vmatpush.bf16.msra.mxu0 %v839
  %859 = vmatpush.bf16.msra.mxu0 %v838
  %860 = vmatpush.bf16.msra.mxu0 %v837
  %861 = vmatmul.bf16.gmra.mxu0 %v799
  %v862 = vpop.f32.mrf.mxu0
  %v863 = vadd.f32 0.0, %v862
  %v864 = vpop.f32.mrf.mxu0
  %v865 = vadd.f32 0.0, %v864
  %866 = vmatmul.bf16.gmra.mxu0 %v801
  %v867 = vpop.f32.mrf.mxu0
  %v868 = vpop.f32.mrf.mxu0
  %v869 = vadd.f32 0.0, %v868
  %870 = vmatmul.bf16.gmra.mxu0 %v800
  %v871 = vpop.f32.mrf.mxu0
  %v872 = vadd.f32 0.0, %v871
  %v873 = vpop.f32.mrf.mxu0
  %874 = vdwg.mxu0
  %v875 = vadd.f32 %v768, %v863
  %v876 = vadd.f32 %v770, %v865
  %v877 = vadd.f32 %v774, %v869
  %v878 = vadd.f32 %v777, %v872
  %v879 = vld [vmem:[%s7] sm:$0x1]
  %v881 = vperm.slane %v879, 0
  %v883 = vadd.f32 %v875, %v881
  %v884 = vadd.f32 %v876, %v881
  %v885 = vadd.f32 %v877, %v881
  %v886 = vadd.f32 %v878, %v881
  %v887 = vmax.f32 %v883, 0.0
  %v888 = vmax.f32 %v884, 0.0
  %v889 = vmax.f32 %v885, 0.0
  %v890 = vmax.f32 %v886, 0.0
  %891 = vst [vmem:[%s9] sm:$0xff] %v887
  %892 = vst [vmem:[%s9 + $0x8] sm:$0xff] %v888
  %s893 = scalar_lea.vmem %s9, 16
  %894 = vst [vmem:[%s893] sm:$0xff] %v889
  %895 = vst [vmem:[%s893 + $0x8] sm:$0xff] %v890
  // Predicated region
  $region38: #{upsample_forward.1} parent=0 // pred_check
    _
  $region39: #{upsample_forward.1} parent=0 // pred_check_branch
    %897 = sbr.rel (0) target = $region41
  $region40: #{upsample_forward.1} parent=0 // pred_region
    _
  $region41: #{upsample_forward.1} parent=0 // pred_fallthru
    _
  // Predicated region
  $region42: #{upsample_forward.1} parent=0 // pred_check
    _
  $region43: #{upsample_forward.1} parent=0 // pred_check_branch
    %899 = sbr.rel (0) target = $region45
  $region44: #{upsample_forward.1} parent=0 // pred_region
    _
  $region45: #{upsample_forward.1} parent=0 // pred_fallthru
    _

</llo_original>
